<compile_context>
chip_gen: v5e
topology: v5e:2x2
jax: 0.10.0
libtpu: 0.0.40
codegen_flags: <defaults>
</compile_context>

<pallas_src>
import jax
import jax.numpy as jnp
from jax import lax
from jax.experimental import pallas as pl
from jax.experimental.pallas import tpu as pltpu

BN_EPS = 1e-5


def _round_up(v, m):
    return (v + m - 1) // m * m


def _pick_tile_l(l_out_p, max_tile):
    """Largest 128-multiple divisor of l_out_p (itself a multiple of 128) <= max_tile."""
    m = l_out_p // 128
    dmax = max(1, min(m, max_tile // 128))
    best = 1
    for d in range(1, dmax + 1):
        if m % d == 0:
            best = d
    return best * 128


def _make_fused_kernel(*, n_batch, k_size, tile_l, halo, l_out, activation):
    inv_cnt = 1.0 / float(n_batch * l_out)
    needs_mask = (l_out % tile_l) != 0   # only the padded-L_out case needs stat masking

    def kernel(x_ref, w_ref, gamma_ref, beta_ref, o_ref,
               sum_ref, sq_ref, scale_ref, shift_ref):
        phase = pl.program_id(0)          # 0 = accumulate batch stats, 1 = normalize
        n = pl.program_id(1)
        j = pl.program_id(2)
        is_first = jnp.logical_and(n == 0, j == 0)

        # ---- Conv tile (C_out, TL) in f32: one aligned wide load, K static shifts. ----
        base = pl.multiple_of(j * tile_l, 128)
        x_wide = x_ref[:, pl.ds(base, tile_l + halo)]        # (C_in, TL+halo), aligned
        y = None
        for k in range(k_size):                              # K small & static -> unrolled
            xk = x_wide[:, k:k + tile_l] if halo else x_wide  # static in-vreg lane shift
            yk = jnp.dot(w_ref[k], xk, preferred_element_type=jnp.float32)
            y = yk if y is None else y + yk                   # (C_out, TL) float32

        # ---- Phase 0: accumulate per-channel sum / sum-of-squares in resident scratch.
        @pl.when(jnp.logical_and(phase == 0, is_first))
        def _init():
            sum_ref[...] = jnp.zeros_like(sum_ref)
            sq_ref[...] = jnp.zeros_like(sq_ref)

        @pl.when(phase == 0)
        def _stats():
            if needs_mask:
                lane = base + lax.broadcasted_iota(jnp.int32, y.shape, 1)
                yv = jnp.where(lane < l_out, y, 0.0)          # drop alignment-pad lanes
            else:
                yv = y
            sum_ref[...] += jnp.sum(yv, axis=1, keepdims=True)     # (C_out, 1)
            sq_ref[...] += jnp.sum(yv * yv, axis=1, keepdims=True)  # (C_out, 1)

        # ---- Phase transition (runs once): batch stats -> fused BN scale/shift. ------
        @pl.when(jnp.logical_and(phase == 1, is_first))
        def _finalize():
            mean = sum_ref[...] * inv_cnt
            # E[y^2] - E[y]^2 in f32; fine at these scales (see correctness notes).
            var = jnp.maximum(sq_ref[...] * inv_cnt - mean * mean, 0.0)
            scale = gamma_ref[...] * lax.rsqrt(var + BN_EPS)
            scale_ref[...] = scale
            shift_ref[...] = beta_ref[...] - mean * scale

        # ---- Phase 1: fused BN affine (+ ReLU), lane-dense NCL store. ----------------
        @pl.when(phase == 1)
        def _write():
            out = y * scale_ref[...] + shift_ref[...]
            if activation:
                out = jnp.maximum(out, 0.0)
            o_ref[...] = out.astype(o_ref.dtype)

    return kernel


def conv_bn_relu(x, weight, bias, gamma, beta, padding, *, activation=True,
                 compute_dtype=jnp.float32, max_tile_l=1024):
    """Forward of ConvBNReLU (train-mode BatchNorm). x: (N, C_in, L) NCL float32.

    Returns (N, C_out, L_out) in x.dtype. `bias` is accepted for API parity but is
    unused: a per-channel constant is exactly cancelled by train-mode BN mean removal.
    """
    del bias  # cancelled by BN mean subtraction (train-mode batch statistics only)
    N, C_in, L = x.shape
    C_out, _, K = weight.shape

    L_pad = L + 2 * padding
    L_out = L_pad - K + 1
    assert L_out >= 1
    L_out_p = _round_up(L_out, 128)                 # lane-aligned output length
    halo = 0 if K == 1 else _round_up(K - 1, 128)   # wide-load extra for the K shifts
    L_xp = L_out_p + halo                           # padded x length (multiple of 128)

    TL = _pick_tile_l(L_out_p, max_tile_l)
    n_tiles = L_out_p // TL
    grid = (2, N, n_tiles)                          # (phase, batch, length tile)

    # Wrapper-side prep only: zero-pad x along L (conv pad + alignment pad in one go),
    # optional downcast, tiny weight reorder. No im2col, no transposes of x or output.
    xp = jnp.pad(x, ((0, 0), (0, 0), (padding, L_xp - L - padding))).astype(compute_dtype)
    w_k = jnp.transpose(weight, (2, 0, 1)).astype(compute_dtype)    # (K, C_out, C_in)
    gamma2 = gamma.astype(jnp.float32).reshape(C_out, 1)
    beta2 = beta.astype(jnp.float32).reshape(C_out, 1)

    kernel = _make_fused_kernel(n_batch=N, k_size=K, tile_l=TL, halo=halo,
                                l_out=L_out, activation=activation)

    out = pl.pallas_call(
        kernel,
        out_shape=jax.ShapeDtypeStruct((N, C_out, L_out_p), x.dtype),
        grid_spec=pltpu.PrefetchScalarGridSpec(
            num_scalar_prefetch=0,
            grid=grid,
            in_specs=[
                # per-batch-element x block, resident across L tiles (and across the
                # phase transition when n is unchanged, e.g. N == 1).
                pl.BlockSpec((pl.Squeezed(), C_in, L_xp), lambda p, n, j: (n, 0, 0)),
                pl.BlockSpec((K, C_out, C_in), lambda p, n, j: (0, 0, 0)),
                pl.BlockSpec((C_out, 1), lambda p, n, j: (0, 0)),
                pl.BlockSpec((C_out, 1), lambda p, n, j: (0, 0)),
            ],
            # Phase 0 parks the output on block (0,0,0): it is never written and the
            # index never changes, so no HBM writeback happens until phase 1 fills it.
            out_specs=pl.BlockSpec((pl.Squeezed(), C_out, TL),
                                   lambda p, n, j: (n * p, 0, j * p)),
            scratch_shapes=[
                pltpu.VMEM((C_out, 1), jnp.float32),   # sum
                pltpu.VMEM((C_out, 1), jnp.float32),   # sum of squares
                pltpu.VMEM((C_out, 1), jnp.float32),   # fused BN scale
                pltpu.VMEM((C_out, 1), jnp.float32),   # fused BN shift
            ]),
        compiler_params=pltpu.CompilerParams(
            # Every axis carries resident state (stat scratch / output revisit), so all
            # axes are sequential. (v7x 2-TC sharding is traded for the fusion.)
            dimension_semantics=("arbitrary", "arbitrary", "arbitrary")),
    )(xp, w_k, gamma2, beta2)

    return out[:, :, :L_out]


def reference(x, weight, bias, gamma, beta, padding, activation=True):
    y = lax.conv_general_dilated(
        x, weight, window_strides=(1,), padding=[(padding, padding)],
        dimension_numbers=("NCH", "OIH", "NCH"))
    y = y + bias[None, :, None]
    mean = jnp.mean(y, axis=(0, 2), keepdims=True)
    var = jnp.mean((y - mean) ** 2, axis=(0, 2), keepdims=True)
    y = (y - mean) * lax.rsqrt(var + BN_EPS)
    y = y * gamma[None, :, None] + beta[None, :, None]
    return jnp.maximum(y, 0.0) if activation else y


if __name__ == "__main__":
    # Module config: ConvBNReLU(in_channels=4, out_channels=8, kernel_size=3, padding=1)
    N, C_in, L = 2, 4, 16
    C_out, K, padding = 8, 3, 1

    key = jax.random.PRNGKey(0)
    kx, kw, kb, kg, kbe = jax.random.split(key, 5)
    x = jax.random.normal(kx, (N, C_in, L), dtype=jnp.float32)
    bound = 1.0 / (C_in * K) ** 0.5
    weight = jax.random.uniform(kw, (C_out, C_in, K), jnp.float32, -bound, bound)
    bias = jax.random.uniform(kb, (C_out,), jnp.float32, -bound, bound)
    gamma = jax.random.uniform(kg, (C_out,), jnp.float32, 0.5, 1.5)
    beta = 0.1 * jax.random.normal(kbe, (C_out,), jnp.float32)

    ref = reference(x, weight, bias, gamma, beta, padding)

    # f32 path: matches the f32 PyTorch module tightly.
    out = jax.block_until_ready(conv_bn_relu(x, weight, bias, gamma, beta, padding))
    assert out.shape == (N, C_out, L)
    assert jnp.allclose(out, ref, atol=1e-4, rtol=1e-4), \
        float(jnp.max(jnp.abs(out - ref)))

    # bf16 fast path (MXU-native, halves x HBM/VMEM footprint; recommended on v6e/v7x).
    # Compare against the reference on bf16-rounded inputs so only kernel error shows.
    ref_bf16 = reference(
        x.astype(jnp.bfloat16).astype(jnp.float32),
        weight.astype(jnp.bfloat16).astype(jnp.float32),
        bias, gamma, beta, padding)
    out_bf16 = jax.block_until_ready(
        conv_bn_relu(x, weight, bias, gamma, beta, padding,
                     compute_dtype=jnp.bfloat16))
    assert jnp.allclose(out_bf16, ref_bf16, atol=2e-3, rtol=2e-3), \
        float(jnp.max(jnp.abs(out_bf16 - ref_bf16)))

    print("KERNEL_OK")
</pallas_src>

<mosaic_0001>
module attributes {stable_mosaic.version = 11 : i64} {
  func.func @kernel(%arg0: i32, %arg1: i32, %arg2: i32, %arg3: memref<1x4x256xf32, #tpu.memory_space<vmem>>, %arg4: memref<3x8x4xf32, #tpu.memory_space<vmem>>, %arg5: memref<8x1xf32, #tpu.memory_space<vmem>>, %arg6: memref<8x1xf32, #tpu.memory_space<vmem>>, %arg7: memref<1x8x128xf32, #tpu.memory_space<vmem>>, %arg8: memref<8x1xf32, #tpu.memory_space<vmem>>, %arg9: memref<8x1xf32, #tpu.memory_space<vmem>>, %arg10: memref<8x1xf32, #tpu.memory_space<vmem>>, %arg11: memref<8x1xf32, #tpu.memory_space<vmem>>) attributes {dimension_semantics = [#tpu.dimension_semantics<arbitrary>, #tpu.dimension_semantics<arbitrary>, #tpu.dimension_semantics<arbitrary>], iteration_bounds = array<i64: 2, 2, 1>, scalar_prefetch = 0 : i64, scratch_operands = 4 : i64, tpu.core_type = #tpu.core_type<tc>, window_params = [{transform_indices = @transform_0, window_bounds = array<i64: 1, 4, 256>}, {pipeline_mode = #tpu.pipeline_mode<synchronous>, transform_indices = @transform_1, window_bounds = array<i64: 3, 8, 4>}, {pipeline_mode = #tpu.pipeline_mode<synchronous>, transform_indices = @transform_2, window_bounds = array<i64: 8, 1>}, {pipeline_mode = #tpu.pipeline_mode<synchronous>, transform_indices = @transform_3, window_bounds = array<i64: 8, 1>}, {transform_indices = @transform_4, window_bounds = array<i64: 1, 8, 128>}]} {
    %c0_i32 = arith.constant 0 : i32
    %0 = arith.cmpi eq, %arg1, %c0_i32 : i32
    %c0_i32_0 = arith.constant 0 : i32
    %1 = arith.cmpi eq, %arg2, %c0_i32_0 : i32
    %2 = arith.andi %0, %1 : i1
    %c128_i32 = arith.constant 128 : i32
    %3 = arith.muli %arg2, %c128_i32 : i32
    %4 = tpu.assume_multiple %3, 128 : i32
    %c0 = arith.constant 0 : index
    %c0_1 = arith.constant 0 : index
    %5 = arith.index_cast %4 : i32 to index
    %6 = vector.load %arg3[%c0, %c0_1, %5] : memref<1x4x256xf32, #tpu.memory_space<vmem>>, vector<1x4x256xf32>
    %7 = vector.shape_cast %6 : vector<1x4x256xf32> to vector<4x256xf32>
    %8 = vector.extract_strided_slice %7 {offsets = [0, 0], sizes = [4, 128], strides = [1, 1]} : vector<4x256xf32> to vector<4x128xf32>
    %c0_2 = arith.constant 0 : index
    %c0_3 = arith.constant 0 : index
    %c0_4 = arith.constant 0 : index
    %9 = vector.load %arg4[%c0_2, %c0_3, %c0_4] : memref<3x8x4xf32, #tpu.memory_space<vmem>>, vector<1x8x4xf32>
    %10 = vector.shape_cast %9 : vector<1x8x4xf32> to vector<8x4xf32>
    %cst = arith.constant dense<0.000000e+00> : vector<8x128xf32>
    %11 = tpu.matmul %10, %8, %cst {dimension_numbers = #tpu.dot_dimension_numbers<[1], [0], [0], [1], [0, 0, 1, 1], [], []>} : vector<8x4xf32>, vector<4x128xf32>, vector<8x128xf32> -> vector<8x128xf32>
    %12 = vector.extract_strided_slice %7 {offsets = [0, 1], sizes = [4, 128], strides = [1, 1]} : vector<4x256xf32> to vector<4x128xf32>
    %c1 = arith.constant 1 : index
    %c0_5 = arith.constant 0 : index
    %c0_6 = arith.constant 0 : index
    %13 = vector.load %arg4[%c1, %c0_5, %c0_6] : memref<3x8x4xf32, #tpu.memory_space<vmem>>, vector<1x8x4xf32>
    %14 = vector.shape_cast %13 : vector<1x8x4xf32> to vector<8x4xf32>
    %cst_7 = arith.constant dense<0.000000e+00> : vector<8x128xf32>
    %15 = tpu.matmul %14, %12, %cst_7 {dimension_numbers = #tpu.dot_dimension_numbers<[1], [0], [0], [1], [0, 0, 1, 1], [], []>} : vector<8x4xf32>, vector<4x128xf32>, vector<8x128xf32> -> vector<8x128xf32>
    %16 = arith.addf %11, %15 : vector<8x128xf32>
    %17 = vector.extract_strided_slice %7 {offsets = [0, 2], sizes = [4, 128], strides = [1, 1]} : vector<4x256xf32> to vector<4x128xf32>
    %c2 = arith.constant 2 : index
    %c0_8 = arith.constant 0 : index
    %c0_9 = arith.constant 0 : index
    %18 = vector.load %arg4[%c2, %c0_8, %c0_9] : memref<3x8x4xf32, #tpu.memory_space<vmem>>, vector<1x8x4xf32>
    %19 = vector.shape_cast %18 : vector<1x8x4xf32> to vector<8x4xf32>
    %cst_10 = arith.constant dense<0.000000e+00> : vector<8x128xf32>
    %20 = tpu.matmul %19, %17, %cst_10 {dimension_numbers = #tpu.dot_dimension_numbers<[1], [0], [0], [1], [0, 0, 1, 1], [], []>} : vector<8x4xf32>, vector<4x128xf32>, vector<8x128xf32> -> vector<8x128xf32>
    %21 = arith.addf %16, %20 : vector<8x128xf32>
    %c0_i32_11 = arith.constant 0 : i32
    %22 = arith.cmpi eq, %arg0, %c0_i32_11 : i32
    %23 = arith.andi %22, %2 : i1
    %24 = arith.extui %23 : i1 to i32
    %c0_i32_12 = arith.constant 0 : i32
    %25 = arith.cmpi ne, %24, %c0_i32_12 : i32
    scf.if %25 {
      %cst_18 = arith.constant 0.000000e+00 : f32
      %36 = vector.broadcast %cst_18 : f32 to vector<8x1xf32>
      %c0_19 = arith.constant 0 : index
      %c0_20 = arith.constant 0 : index
      %37 = vector.load %arg8[%c0_19, %c0_20] : memref<8x1xf32, #tpu.memory_space<vmem>>, vector<8x1xf32>
      tpu.vector_store %arg8[%c0_19, %c0_20], %36 {strides = array<i32>} : memref<8x1xf32, #tpu.memory_space<vmem>>, vector<8x1xf32>,
      %cst_21 = arith.constant 0.000000e+00 : f32
      %38 = vector.broadcast %cst_21 : f32 to vector<8x1xf32>
      %c0_22 = arith.constant 0 : index
      %c0_23 = arith.constant 0 : index
      %39 = vector.load %arg9[%c0_22, %c0_23] : memref<8x1xf32, #tpu.memory_space<vmem>>, vector<8x1xf32>
      tpu.vector_store %arg9[%c0_22, %c0_23], %38 {strides = array<i32>} : memref<8x1xf32, #tpu.memory_space<vmem>>, vector<8x1xf32>,
    } else {
    }
    %c0_i32_13 = arith.constant 0 : i32
    %26 = arith.cmpi eq, %arg0, %c0_i32_13 : i32
    %27 = arith.extui %26 : i1 to i32
    %c0_i32_14 = arith.constant 0 : i32
    %28 = arith.cmpi ne, %27, %c0_i32_14 : i32
    scf.if %28 {
      %36 = tpu.iota {dimensions = array<i32: 1>} : vector<8x128xi32>
      %37 = vector.broadcast %4 : i32 to vector<8x128xi32>
      %38 = arith.addi %37, %36 : vector<8x128xi32>
      %c16_i32 = arith.constant 16 : i32
      %39 = vector.broadcast %c16_i32 : i32 to vector<8x128xi32>
      %40 = arith.cmpi slt, %38, %39 : vector<8x128xi32>
      %cst_18 = arith.constant 0.000000e+00 : f32
      %41 = vector.broadcast %cst_18 : f32 to vector<8x128xf32>
      %42 = arith.select %40, %21, %41 : vector<8x128xi1>, vector<8x128xf32>
      %c0_19 = arith.constant 0 : index
      %c0_20 = arith.constant 0 : index
      %43 = vector.load %arg8[%c0_19, %c0_20] : memref<8x1xf32, #tpu.memory_space<vmem>>, vector<8x1xf32>
      %cst_21 = arith.constant dense<0.000000e+00> : vector<8xf32>
      %44 = vector.multi_reduction <add>, %42, %cst_21 [1] : vector<8x128xf32> to vector<8xf32>
      %45 = vector.shape_cast %44 : vector<8xf32> to vector<8x1xf32>
      %46 = arith.addf %43, %45 : vector<8x1xf32>
      %c0_22 = arith.constant 0 : index
      %c0_23 = arith.constant 0 : index
      %47 = vector.load %arg8[%c0_22, %c0_23] : memref<8x1xf32, #tpu.memory_space<vmem>>, vector<8x1xf32>
      tpu.vector_store %arg8[%c0_22, %c0_23], %46 {strides = array<i32>} : memref<8x1xf32, #tpu.memory_space<vmem>>, vector<8x1xf32>,
      %c0_24 = arith.constant 0 : index
      %c0_25 = arith.constant 0 : index
      %48 = vector.load %arg9[%c0_24, %c0_25] : memref<8x1xf32, #tpu.memory_space<vmem>>, vector<8x1xf32>
      %49 = arith.mulf %42, %42 : vector<8x128xf32>
      %cst_26 = arith.constant dense<0.000000e+00> : vector<8xf32>
      %50 = vector.multi_reduction <add>, %49, %cst_26 [1] : vector<8x128xf32> to vector<8xf32>
      %51 = vector.shape_cast %50 : vector<8xf32> to vector<8x1xf32>
      %52 = arith.addf %48, %51 : vector<8x1xf32>
      %c0_27 = arith.constant 0 : index
      %c0_28 = arith.constant 0 : index
      %53 = vector.load %arg9[%c0_27, %c0_28] : memref<8x1xf32, #tpu.memory_space<vmem>>, vector<8x1xf32>
      tpu.vector_store %arg9[%c0_27, %c0_28], %52 {strides = array<i32>} : memref<8x1xf32, #tpu.memory_space<vmem>>, vector<8x1xf32>,
    } else {
    }
    %c1_i32 = arith.constant 1 : i32
    %29 = arith.cmpi eq, %arg0, %c1_i32 : i32
    %30 = arith.andi %29, %2 : i1
    %31 = arith.extui %30 : i1 to i32
    %c0_i32_15 = arith.constant 0 : i32
    %32 = arith.cmpi ne, %31, %c0_i32_15 : i32
    scf.if %32 {
      %c0_18 = arith.constant 0 : index
      %c0_19 = arith.constant 0 : index
      %36 = vector.load %arg8[%c0_18, %c0_19] : memref<8x1xf32, #tpu.memory_space<vmem>>, vector<8x1xf32>
      %cst_20 = arith.constant 3.125000e-02 : f32
      %37 = vector.broadcast %cst_20 : f32 to vector<8x1xf32>
      %38 = arith.mulf %36, %37 : vector<8x1xf32>
      %c0_21 = arith.constant 0 : index
      %c0_22 = arith.constant 0 : index
      %39 = vector.load %arg9[%c0_21, %c0_22] : memref<8x1xf32, #tpu.memory_space<vmem>>, vector<8x1xf32>
      %cst_23 = arith.constant 3.125000e-02 : f32
      %40 = vector.broadcast %cst_23 : f32 to vector<8x1xf32>
      %41 = arith.mulf %39, %40 : vector<8x1xf32>
      %42 = arith.mulf %38, %38 : vector<8x1xf32>
      %43 = arith.subf %41, %42 : vector<8x1xf32>
      %cst_24 = arith.constant 0.000000e+00 : f32
      %44 = vector.broadcast %cst_24 : f32 to vector<8x1xf32>
      %45 = arith.maximumf %43, %44 : vector<8x1xf32>
      %c0_25 = arith.constant 0 : index
      %c0_26 = arith.constant 0 : index
      %46 = vector.load %arg5[%c0_25, %c0_26] : memref<8x1xf32, #tpu.memory_space<vmem>>, vector<8x1xf32>
      %cst_27 = arith.constant 9.99999974E-6 : f32
      %47 = vector.broadcast %cst_27 : f32 to vector<8x1xf32>
      %48 = arith.addf %45, %47 : vector<8x1xf32>
      %49 = math.rsqrt %48 : vector<8x1xf32>
      %50 = arith.mulf %46, %49 : vector<8x1xf32>
      %c0_28 = arith.constant 0 : index
      %c0_29 = arith.constant 0 : index
      %51 = vector.load %arg10[%c0_28, %c0_29] : memref<8x1xf32, #tpu.memory_space<vmem>>, vector<8x1xf32>
      tpu.vector_store %arg10[%c0_28, %c0_29], %50 {strides = array<i32>} : memref<8x1xf32, #tpu.memory_space<vmem>>, vector<8x1xf32>,
      %c0_30 = arith.constant 0 : index
      %c0_31 = arith.constant 0 : index
      %52 = vector.load %arg6[%c0_30, %c0_31] : memref<8x1xf32, #tpu.memory_space<vmem>>, vector<8x1xf32>
      %53 = arith.mulf %38, %50 : vector<8x1xf32>
      %54 = arith.subf %52, %53 : vector<8x1xf32>
      %c0_32 = arith.constant 0 : index
      %c0_33 = arith.constant 0 : index
      %55 = vector.load %arg11[%c0_32, %c0_33] : memref<8x1xf32, #tpu.memory_space<vmem>>, vector<8x1xf32>
      tpu.vector_store %arg11[%c0_32, %c0_33], %54 {strides = array<i32>} : memref<8x1xf32, #tpu.memory_space<vmem>>, vector<8x1xf32>,
    } else {
    }
    %c1_i32_16 = arith.constant 1 : i32
    %33 = arith.cmpi eq, %arg0, %c1_i32_16 : i32
    %34 = arith.extui %33 : i1 to i32
    %c0_i32_17 = arith.constant 0 : i32
    %35 = arith.cmpi ne, %34, %c0_i32_17 : i32
    scf.if %35 {
      %c0_18 = arith.constant 0 : index
      %c0_19 = arith.constant 0 : index
      %36 = vector.load %arg10[%c0_18, %c0_19] : memref<8x1xf32, #tpu.memory_space<vmem>>, vector<8x1xf32>
      %37 = vector.broadcast %36 : vector<8x1xf32> to vector<8x128xf32>
      %38 = arith.mulf %21, %37 : vector<8x128xf32>
      %c0_20 = arith.constant 0 : index
      %c0_21 = arith.constant 0 : index
      %39 = vector.load %arg11[%c0_20, %c0_21] : memref<8x1xf32, #tpu.memory_space<vmem>>, vector<8x1xf32>
      %40 = vector.broadcast %39 : vector<8x1xf32> to vector<8x128xf32>
      %41 = arith.addf %38, %40 : vector<8x128xf32>
      %cst_22 = arith.constant 0.000000e+00 : f32
      %42 = vector.broadcast %cst_22 : f32 to vector<8x128xf32>
      %43 = arith.maximumf %41, %42 : vector<8x128xf32>
      %c0_23 = arith.constant 0 : index
      %c0_24 = arith.constant 0 : index
      %c0_25 = arith.constant 0 : index
      %44 = vector.load %arg7[%c0_23, %c0_24, %c0_25] : memref<1x8x128xf32, #tpu.memory_space<vmem>>, vector<1x8x128xf32>
      %45 = vector.shape_cast %44 : vector<1x8x128xf32> to vector<8x128xf32>
      %46 = vector.shape_cast %43 : vector<8x128xf32> to vector<1x8x128xf32>
      tpu.vector_store %arg7[%c0_23, %c0_24, %c0_25], %46 {strides = array<i32>} : memref<1x8x128xf32, #tpu.memory_space<vmem>>, vector<1x8x128xf32>,
    } else {
    }
    return
  }
  func.func @transform_0(%arg0: i32, %arg1: i32, %arg2: i32) -> (i32, i32, i32) {
    %c0_i32 = arith.constant 0 : i32
    %c0_i32_0 = arith.constant 0 : i32
    %c0_i32_1 = arith.constant 0 : i32
    return %arg1, %c0_i32, %c0_i32_0 : i32, i32, i32
  }
  func.func @transform_1(%arg0: i32, %arg1: i32, %arg2: i32) -> (i32, i32, i32) {
    %c0_i32 = arith.constant 0 : i32
    %c0_i32_0 = arith.constant 0 : i32
    %c0_i32_1 = arith.constant 0 : i32
    %c0_i32_2 = arith.constant 0 : i32
    return %c0_i32, %c0_i32_0, %c0_i32_1 : i32, i32, i32
  }
  func.func @transform_2(%arg0: i32, %arg1: i32, %arg2: i32) -> (i32, i32) {
    %c0_i32 = arith.constant 0 : i32
    %c0_i32_0 = arith.constant 0 : i32
    %c0_i32_1 = arith.constant 0 : i32
    return %c0_i32, %c0_i32_0 : i32, i32
  }
  func.func @transform_3(%arg0: i32, %arg1: i32, %arg2: i32) -> (i32, i32) {
    %c0_i32 = arith.constant 0 : i32
    %c0_i32_0 = arith.constant 0 : i32
    %c0_i32_1 = arith.constant 0 : i32
    return %c0_i32, %c0_i32_0 : i32, i32
  }
  func.func @transform_4(%arg0: i32, %arg1: i32, %arg2: i32) -> (i32, i32, i32) {
    %0 = arith.muli %arg1, %arg0 : i32
    %1 = arith.muli %arg2, %arg0 : i32
    %c0_i32 = arith.constant 0 : i32
    %c0_i32_0 = arith.constant 0 : i32
    return %0, %c0_i32, %1 : i32, i32, i32
  }
}

</mosaic_0001>

<llo_original>
// kernel: tpu_custom_call.1
$region0: #{tpu_custom_call.1}
  #allocation0 [shape = 'u32[]', space=smem, size = 0x4, offset = 0x4, fixed_abs, tag = 'smem constant byte address 0x4 - core index']
  #allocation1 [shape = 'u32[72,128]{1,0:T(1,128)}', space=vmem, size = 0x9000, scoped, tag = 'internal scratch']
  #allocation2 [shape = 'f32[8,1]{1,0:T(8,128)}', space=vmem, size = 0x1000, scoped, tag = 'scratch operand']
  #allocation3 [shape = 'f32[8,1]{1,0:T(8,128)}', space=vmem, size = 0x1000, scoped, tag = 'scratch operand']
  #allocation4 [shape = 'f32[8,1]{1,0:T(8,128)}', space=vmem, size = 0x1000, scoped, tag = 'scratch operand']
  #allocation5 [shape = 'f32[8,1]{1,0:T(8,128)}', space=vmem, size = 0x1000, scoped, tag = 'scratch operand']
  %s0 = inlined_call_operand.vmem [shape: f32[2,4,256], index: 0, kind: input, shape index: {}]
  %s1 = inlined_call_operand.vmem [shape: f32[3,8,4], index: 1, kind: input, shape index: {}]
  %s2 = inlined_call_operand.vmem [shape: f32[8,1], index: 2, kind: input, shape index: {}]
  %s3 = inlined_call_operand.vmem [shape: f32[8,1], index: 3, kind: input, shape index: {}]
  %s4 = inlined_call_operand.hbm [shape: f32[2,8,128], index: 4, kind: output, shape index: {}]
  %s5 = sld [smem:[#allocation0]]
  $region65: #{tpu_custom_call.1} parent=0
    _
  %s7 = ssub.s32 1, %s5
  %s8 = scalar_select 0, %s7, %s5
  $region1: #{tpu_custom_call.1} parent=0
    #allocation6 [shape = 'u8[8192]{0}', space=vmem, size = 0x2000, scoped, tag = 'output window, operand 0']
    #allocation7 [shape = 's32[2]{0}', space=sflag, size = 0x8, scoped, tag = 'scoped memory for tpu_custom_call.1']
    %9 = vsyncpa [#allocation7], 0
    %s10 = scalar_lea.sflag [#allocation7], 1
    %11 = vsyncpa %s10, 0
    loop: start=0, step=1, limit=6
    $region2: #{tpu_custom_call.1} parent=1 // loop_pre_header
      _
    $region3: #{tpu_custom_call.1} parent=1 // loop_header
      %s13 = sphi 0, %s17
      %p14 = scmp.ge.s32.totalorder %s13, 6
      %s20 = sphi 0, %s39
      %s21 = sphi 0, %s35
      %s22 = sphi 0, %s31
      %s23 = sphi 0, %s20
      %s24 = sphi 0, %s21
      %s25 = sphi 0, %s22
      %s26 = sphi 0, %s23
      %s27 = sphi 0, %s24
      %s28 = sphi 0, %s25
      %s42 = sphi 0, %s44
      %s45 = sphi 0, %s42
      %s46 = sphi 0, %s45
      %s62 = sphi 0, %s46
      %s66 = sphi 0, %s66
      %s68 = sphi 0, %s66
      %s69 = sphi 0, %s68
      %s83 = sphi 0, %s69
      %s87 = sphi 0, %s87
      %s89 = sphi 0, %s87
      %s90 = sphi 0, %s89
      %s104 = sphi 0, %s90
      %s108 = sphi 0, %s108
      %s110 = sphi 0, %s108
      %s111 = sphi 0, %s110
      %s125 = sphi 0, %s111
      %s137 = sphi 0, %s139
      %s140 = sphi 0, %s137
      %s141 = sphi 0, %s140
      %s157 = sphi 0, %s141
    $region4: #{tpu_custom_call.1} parent=1 // loop_header_branch
      %16 = sbr.rel (%p14) target = $region8
    $region5: #{tpu_custom_call.1} parent=1 // loop_body
      %s18 = ssub.s32 %s13, 1
      %s19 = ssub.s32 %s13, 2
      %s29 = sadd.s32 1, %s22
      %p30 = scmp.ge.s32.totalorder %s29, 1
      %s31 = scalar_select %p30, 0, %s29
      %s32 = sadd.s32 1, %s21
      %s33 = scalar_select %p30, %s32, %s21
      %p34 = scmp.ge.s32.totalorder %s33, 2
      %s35 = scalar_select %p34, 0, %s33
      %s36 = sadd.s32 1, %s20
      %s37 = scalar_select %p34, %s36, %s20
      %p38 = scmp.ge.s32.totalorder %s37, 2
      %s39 = scalar_select %p38, 0, %s37
      %s40 = ssub.s32 %s21, %s35
      %p41 = scmp.eq.s32.totalorder %s40, 0
      %s43 = sadd.s32 %s42, 1
      %s44 = scalar_select %p41, %s42, %s43
      %p47 = pneg %p41
      %p48 = scmp.eq.s32.totalorder %s13, 3
      %p49 = por %p47, %p48
      %p50 = scmp.ne.s32.totalorder %s42, %s45
      %p51 = scmp.eq.s32.totalorder %s13, 0
      %p52 = por %p50, %p51
      %p53 = scmp.ne.s32.totalorder %s42, %s45
      %p54 = scmp.eq.s32.totalorder %s18, 3
      %p55 = por %p53, %p54
      %p56 = scmp.ne.s32.totalorder %s45, %s46
      %p57 = scmp.eq.s32.totalorder %s18, 0
      %p58 = por %p56, %p57
      %p59 = scmp.ne.s32.totalorder %s45, %s46
      %p60 = scmp.eq.s32.totalorder %s19, 3
      %p61 = por %p59, %p60
      %p63 = scmp.ne.s32.totalorder %s46, %s62
      %p64 = scmp.eq.s32.totalorder %s19, 0
      %p65 = por %p63, %p64
      %s67 = sadd.s32 %s66, 1
      %p70 = scmp.eq.s32.totalorder %s13, 3
      %p71 = scmp.ne.s32.totalorder %s66, %s68
      %p72 = scmp.eq.s32.totalorder %s13, 0
      %p73 = por %p71, %p72
      %p74 = scmp.ne.s32.totalorder %s66, %s68
      %p75 = scmp.eq.s32.totalorder %s18, 3
      %p76 = por %p74, %p75
      %p77 = scmp.ne.s32.totalorder %s68, %s69
      %p78 = scmp.eq.s32.totalorder %s18, 0
      %p79 = por %p77, %p78
      %p80 = scmp.ne.s32.totalorder %s68, %s69
      %p81 = scmp.eq.s32.totalorder %s19, 3
      %p82 = por %p80, %p81
      %p84 = scmp.ne.s32.totalorder %s69, %s83
      %p85 = scmp.eq.s32.totalorder %s19, 0
      %p86 = por %p84, %p85
      %s88 = sadd.s32 %s87, 1
      %p91 = scmp.eq.s32.totalorder %s13, 3
      %p92 = scmp.ne.s32.totalorder %s87, %s89
      %p93 = scmp.eq.s32.totalorder %s13, 0
      %p94 = por %p92, %p93
      %p95 = scmp.ne.s32.totalorder %s87, %s89
      %p96 = scmp.eq.s32.totalorder %s18, 3
      %p97 = por %p95, %p96
      %p98 = scmp.ne.s32.totalorder %s89, %s90
      %p99 = scmp.eq.s32.totalorder %s18, 0
      %p100 = por %p98, %p99
      %p101 = scmp.ne.s32.totalorder %s89, %s90
      %p102 = scmp.eq.s32.totalorder %s19, 3
      %p103 = por %p101, %p102
      %p105 = scmp.ne.s32.totalorder %s90, %s104
      %p106 = scmp.eq.s32.totalorder %s19, 0
      %p107 = por %p105, %p106
      %s109 = sadd.s32 %s108, 1
      %p112 = scmp.eq.s32.totalorder %s13, 3
      %p113 = scmp.ne.s32.totalorder %s108, %s110
      %p114 = scmp.eq.s32.totalorder %s13, 0
      %p115 = por %p113, %p114
      %p116 = scmp.ne.s32.totalorder %s108, %s110
      %p117 = scmp.eq.s32.totalorder %s18, 3
      %p118 = por %p116, %p117
      %p119 = scmp.ne.s32.totalorder %s110, %s111
      %p120 = scmp.eq.s32.totalorder %s18, 0
      %p121 = por %p119, %p120
      %p122 = scmp.ne.s32.totalorder %s110, %s111
      %p123 = scmp.eq.s32.totalorder %s19, 3
      %p124 = por %p122, %p123
      %p126 = scmp.ne.s32.totalorder %s111, %s125
      %p127 = scmp.eq.s32.totalorder %s19, 0
      %p128 = por %p126, %p127
      %s129 = smul.u32 %s21, %s20
      %s130 = smul.u32 %s22, %s20
      %s131 = smul.u32 %s35, %s39
      %s132 = smul.u32 %s31, %s39
      %s133 = ssub.s32 %s129, %s131
      %s134 = ssub.s32 %s130, %s132
      %s135 = sor.u32 %s133, %s134
      %p136 = scmp.eq.s32.totalorder %s135, 0
      %s138 = sadd.s32 %s137, 1
      %s139 = scalar_select %p136, %s137, %s138
      %p142 = pneg %p136
      %p143 = scmp.eq.s32.totalorder %s13, 3
      %p144 = por %p142, %p143
      %p145 = scmp.ne.s32.totalorder %s137, %s140
      %p146 = scmp.eq.s32.totalorder %s13, 0
      %p147 = por %p145, %p146
      %p148 = scmp.ne.s32.totalorder %s137, %s140
      %p149 = scmp.eq.s32.totalorder %s18, 3
      %p150 = por %p148, %p149
      %p151 = scmp.ne.s32.totalorder %s140, %s141
      %p152 = scmp.eq.s32.totalorder %s18, 0
      %p153 = por %p151, %p152
      %p154 = scmp.ne.s32.totalorder %s140, %s141
      %p155 = scmp.eq.s32.totalorder %s19, 3
      %p156 = por %p154, %p155
      %p158 = scmp.ne.s32.totalorder %s141, %s157
      %p159 = scmp.eq.s32.totalorder %s19, 0
      %p160 = por %p158, %p159
      %p161 = scmp.le.s32.totalorder 1, %s13
      %p162 = scmp.lt.s32.totalorder %s13, 5
      %p163 = pnand %p161, %p162
      %p164 = pneg %p163
      // Predicated region
      $region9: #{tpu_custom_call.1} parent=5 // pred_check
        _
      $region10: #{tpu_custom_call.1} parent=5 // pred_check_branch
        %166 = sbr.rel (%p163) target = $region12
      $region11: #{tpu_custom_call.1} parent=5 // pred_region
        %s167 = ssub.s32 %s13, 1
        // Predicated region
        $region13: #{tpu_custom_call.1} parent=11 // pred_check
          %p168 = pneg %p79
        $region14: #{tpu_custom_call.1} parent=11 // pred_check_branch
          %170 = sbr.rel (%p168) target = $region16
        $region15: #{tpu_custom_call.1} parent=11 // pred_region
          _
        $region16: #{tpu_custom_call.1} parent=11 // pred_fallthru
          _
        // Predicated region
        $region17: #{tpu_custom_call.1} parent=11 // pred_check
          %p171 = pneg %p100
        $region18: #{tpu_custom_call.1} parent=11 // pred_check_branch
          %173 = sbr.rel (%p171) target = $region20
        $region19: #{tpu_custom_call.1} parent=11 // pred_region
          _
        $region20: #{tpu_custom_call.1} parent=11 // pred_fallthru
          _
        // Predicated region
        $region21: #{tpu_custom_call.1} parent=11 // pred_check
          %p174 = pneg %p121
        $region22: #{tpu_custom_call.1} parent=11 // pred_check_branch
          %176 = sbr.rel (%p174) target = $region24
        $region23: #{tpu_custom_call.1} parent=11 // pred_region
          _
        $region24: #{tpu_custom_call.1} parent=11 // pred_fallthru
          _
      $region12: #{tpu_custom_call.1} parent=5 // pred_fallthru
        _
      %p177 = scmp.lt.s32.totalorder %s13, 4
      // Predicated region
      $region25: #{tpu_custom_call.1} parent=5 // pred_check
        %p178 = pneg %p177
      $region26: #{tpu_custom_call.1} parent=5 // pred_check_branch
        %180 = sbr.rel (%p178) target = $region28
      $region27: #{tpu_custom_call.1} parent=5 // pred_region
        // Predicated region
        $region29: #{tpu_custom_call.1} parent=27 // pred_check
          %p181 = pneg %p52
        $region30: #{tpu_custom_call.1} parent=27 // pred_check_branch
          %183 = sbr.rel (%p181) target = $region32
        $region31: #{tpu_custom_call.1} parent=27 // pred_region
          %p184 = scmp.lt.s32.totalorder %s21, 1
          %s185 = scalar_select %p184, %s21, 1
          %s186 = smul.addr %s185, 2
          %s187 = smul.addr %s186, 4
          %s188 = scalar_lea.vmem %s0, %s187
        $region32: #{tpu_custom_call.1} parent=27 // pred_fallthru
          _
      $region28: #{tpu_custom_call.1} parent=5 // pred_fallthru
        _
      %p189 = scmp.le.s32.totalorder 1, %s13
      %p190 = scmp.lt.s32.totalorder %s13, 5
      %p191 = pnand %p189, %p190
      %p192 = pneg %p191
      // Predicated region
      $region33: #{tpu_custom_call.1} parent=5 // pred_check
        _
      $region34: #{tpu_custom_call.1} parent=5 // pred_check_branch
        %194 = sbr.rel (%p191) target = $region36
      $region35: #{tpu_custom_call.1} parent=5 // pred_region
        %s195 = ssub.s32 %s13, 1
        %p196 = scmp.lt.s32.totalorder %s24, 1
        %s197 = scalar_select %p196, %s24, 1
        %s198 = smul.addr %s197, 2
        %s199 = smul.addr %s198, 4
        %s200 = scalar_lea.vmem %s0, %s199
        %p201 = pneg %p58
        %p202 = pneg %p55
        %p203 = pneg %p79
        %p204 = pneg %p76
        %p205 = pneg %p100
        %p206 = pneg %p97
        %p207 = pneg %p121
        %p208 = pneg %p118
        %p209 = pneg %p153
        %p210 = pneg %p150
        %s211 = sand.u32 %s140, 1
        %s212 = scalar_lea.sflag [#allocation7], %s211
        %s213 = sand.u32 %s140, 1
        %s214 = smul.addr %s213, 8
        %s215 = scalar_lea.vmem [#allocation6], %s214
        %p216 = scmp.lt.s32.totalorder %s24, 1
        %s217 = scalar_select %p216, %s24, 1
        %s218 = smul.addr %s217, 2
        %s219 = smul.addr %s218, 4
        %s220 = scalar_lea.vmem %s0, %s219
        %s221 = smul.u32 %s24, %s23
        %s222 = smul.u32 %s25, %s23
        %p223 = scmp.eq.s32.totalorder %s24, 0
        %p224 = scmp.eq.s32.totalorder %s25, 0
        %p225 = pnand %p223, %p224
        %p226 = pneg %p225
        %s227 = smul.u32 %s25, 128
        %s228 = sshra.s32 %s227, 7
        %s229 = sand.u32 %s227, 127
        %s230 = smul.addr %s228, 4
        %s231 = scalar_lea.vmem %s220, %s230
        %v232 = vld [vmem:[%s231] sm:$0xff]
        %v233 = vld [vmem:[%s1] sm:$0xff]
        %s234 = scalar_lea.vmem %s1, 8
        %v235 = vld [vmem:[%s234] sm:$0xff]
        %237 = vst [vmem:[#allocation1] ss:$2 sm:$0xff] %v232
        %v238 = vld.sshfl [vmem:[#allocation1] sm:$0xff pattern:$0x75316420]
        %v239 = vld.sshfl [vmem:[#allocation1 + $0x8] sm:$0xff pattern:$0x75316420]
        %240 = vrot.lane.b32.xlu0 %v238, 127
        %v241 = vpop.permute.xlu0 %240
        %242 = vrot.lane.b32.xlu0 %v239, 127
        %v243 = vpop.permute.xlu0 %242
        %vm244 = vcmask 1039360
        %v245 = vsel %vm244, %v241, %v243
        %vm246 = vcmask 31744
        %v248 = vsel %vm246, %v235, 0
        %vm250 = vcmask 1043456
        %v251 = vsel %vm250, %v245, 0
        %253 = vmatpush.msra.mxu0 0.0
        %254 = vmatpush.msra.mxu0 0.0
        %255 = vmatpush.msra.mxu0 0.0
        %256 = vmatpush.msra.mxu0 0.0
        %257 = vmatpush.msra.mxu0 0.0
        %258 = vmatpush.msra.mxu0 0.0
        %259 = vmatpush.msra.mxu0 0.0
        %260 = vmatpush.msra.mxu0 0.0
        %261 = vmatpush.msra.mxu0 0.0
        %262 = vmatpush.msra.mxu0 0.0
        %263 = vmatpush.msra.mxu0 0.0
        %264 = vmatpush.msra.mxu0 0.0
        %265 = vmatpush.msra.mxu0 0.0
        %266 = vmatpush.msra.mxu0 0.0
        %267 = vmatpush.msra.mxu0 0.0
        %268 = vmatpush.msra.mxu0 %v251
        %269 = vmatmul.f32.gmra.mxu0 %v248
        %v270 = vpop.f32.mrf.mxu0
        %v271 = vadd.f32 0.0, %v270
        %272 = vdwg.mxu0
        %v274 = vsel %vm246, %v233, 0
        %v276 = vsel %vm250, %v232, 0
        %278 = vmatpush.msra.mxu0 0.0
        %279 = vmatpush.msra.mxu0 0.0
        %280 = vmatpush.msra.mxu0 0.0
        %281 = vmatpush.msra.mxu0 0.0
        %282 = vmatpush.msra.mxu0 0.0
        %283 = vmatpush.msra.mxu0 0.0
        %284 = vmatpush.msra.mxu0 0.0
        %285 = vmatpush.msra.mxu0 0.0
        %286 = vmatpush.msra.mxu0 0.0
        %287 = vmatpush.msra.mxu0 0.0
        %288 = vmatpush.msra.mxu0 0.0
        %289 = vmatpush.msra.mxu0 0.0
        %290 = vmatpush.msra.mxu0 0.0
        %291 = vmatpush.msra.mxu0 0.0
        %292 = vmatpush.msra.mxu0 0.0
        %293 = vmatpush.msra.mxu0 %v276
        %294 = vmatmul.f32.gmra.mxu0 %v274
        %v295 = vpop.f32.mrf.mxu0
        %v296 = vadd.f32 %v271, %v295
        %297 = vdwg.mxu0
        %s298 = scalar_lea.vmem %s1, 16
        %v299 = vld [vmem:[%s298] sm:$0xff]
        %300 = vst [vmem:[#allocation1] ss:$2 sm:$0xff] %v232
        %v301 = vld.sshfl [vmem:[#allocation1] sm:$0xff pattern:$0x75316420]
        %v302 = vld.sshfl [vmem:[#allocation1 + $0x8] sm:$0xff pattern:$0x75316420]
        %303 = vrot.lane.b32.xlu0 %v301, 126
        %v304 = vpop.permute.xlu0 %303
        %305 = vrot.lane.b32.xlu0 %v302, 126
        %v306 = vpop.permute.xlu0 %305
        %vm307 = vcmask 1031168
        %v308 = vsel %vm307, %v304, %v306
        %v310 = vsel %vm246, %v299, 0
        %v312 = vsel %vm250, %v308, 0
        %314 = vmatpush.msra.mxu0 0.0
        %315 = vmatpush.msra.mxu0 0.0
        %316 = vmatpush.msra.mxu0 0.0
        %317 = vmatpush.msra.mxu0 0.0
        %318 = vmatpush.msra.mxu0 0.0
        %319 = vmatpush.msra.mxu0 0.0
        %320 = vmatpush.msra.mxu0 0.0
        %321 = vmatpush.msra.mxu0 0.0
        %322 = vmatpush.msra.mxu0 0.0
        %323 = vmatpush.msra.mxu0 0.0
        %324 = vmatpush.msra.mxu0 0.0
        %325 = vmatpush.msra.mxu0 0.0
        %326 = vmatpush.msra.mxu0 0.0
        %327 = vmatpush.msra.mxu0 0.0
        %328 = vmatpush.msra.mxu0 0.0
        %329 = vmatpush.msra.mxu0 %v312
        %330 = vmatmul.f32.gmra.mxu0 %v310
        %v331 = vpop.f32.mrf.mxu0
        %v332 = vadd.f32 0.0, %v331
        %333 = vdwg.mxu0
        %v334 = vadd.f32 %v296, %v332
        %p335 = scmp.eq.s32.totalorder %s23, 0
        %p336 = pnand %p335, %p226
        %p337 = pneg %p336
        // Predicated region
        $region37: #{tpu_custom_call.1} parent=35 // pred_check
          _
        $region38: #{tpu_custom_call.1} parent=35 // pred_check_branch
          %339 = sbr.rel (%p336) target = $region40
        $region39: #{tpu_custom_call.1} parent=35 // pred_region
          %vm340 = vcmask 7168
          %341 = vst.msk [vmem:[#allocation2] sm:$0xff] %vm340, 0.0
          %342 = vst.msk [vmem:[#allocation3] sm:$0xff] %vm340, 0.0
        $region40: #{tpu_custom_call.1} parent=35 // pred_fallthru
          _
        // Predicated region
        $region41: #{tpu_custom_call.1} parent=35 // pred_check
          %p343 = pneg %p335
        $region42: #{tpu_custom_call.1} parent=35 // pred_check_branch
          %345 = sbr.rel (%p343) target = $region44
        $region43: #{tpu_custom_call.1} parent=35 // pred_region
          %v346 = vlaneseq
          %v347 = vand.u32 %v346, 127
          %v348 = vstv %s227
          %v349 = vadd.s32 %v348, %v347
          %vm350 = vcmp.lt.s32.totalorder %v349, 16
          %v351 = vsel %vm350, %v334, 0.0
          %v352 = vld [vmem:[#allocation2] sm:$0xff]
          %353 = vadd.xlane.f32.xlu0 %v351
          %v354 = vpop.xlane.xlu0 %353
          %v355 = vadd.f32 %v352, %v354
          %vm356 = vcmask 7168
          %357 = vst.msk [vmem:[#allocation2] sm:$0xff] %vm356, %v355
          %v358 = vld [vmem:[#allocation3] sm:$0xff]
          %v359 = vmul.f32 %v351, %v351
          %360 = vadd.xlane.f32.xlu0 %v359
          %v361 = vpop.xlane.xlu0 %360
          %v362 = vadd.f32 %v358, %v361
          %363 = vst.msk [vmem:[#allocation3] sm:$0xff] %vm356, %v362
        $region44: #{tpu_custom_call.1} parent=35 // pred_fallthru
          _
        %p364 = scmp.eq.s32.totalorder %s23, 1
        %p365 = pnand %p364, %p226
        %p366 = pneg %p365
        // Predicated region
        $region45: #{tpu_custom_call.1} parent=35 // pred_check
          _
        $region46: #{tpu_custom_call.1} parent=35 // pred_check_branch
          %368 = sbr.rel (%p365) target = $region48
        $region47: #{tpu_custom_call.1} parent=35 // pred_region
          %v369 = vld [vmem:[#allocation2] sm:$0xff]
          %v370 = vmul.f32 %v369, 0.03125
          %v371 = vld [vmem:[#allocation3] sm:$0xff]
          %v372 = vmul.f32 %v371, 0.03125
          %v373 = vmul.f32 %v370, %v370
          %v374 = vsub.f32 %v372, %v373
          %v375 = vmax.f32 %v374, 0.0
          %v376 = vld [vmem:[%s2] sm:$0xff]
          %v377 = vadd.f32 %v375, 1e-05
          %v378 = vrsqrt.pop %v377
          %v379 = vmul.f32 %v378, %v377
          %v380 = vmul.f32 %v379, %v378
          %v381 = vmul.f32 0.5, %v380
          %v382 = vsub.f32 1.5, %v381
          %v383 = vmul.f32 %v378, %v382
          %vm384 = vweird.f32 %v377
          %vm385 = vweird.f32 %v378
          %vm386 = vmor %vm384, %vm385
          %v387 = vsel %vm386, %v378, %v383
          %v388 = vmul.f32 %v376, %v387
          %vm389 = vcmask 7168
          %390 = vst.msk [vmem:[#allocation4] sm:$0xff] %vm389, %v388
          %v391 = vld [vmem:[%s3] sm:$0xff]
          %v392 = vmul.f32 %v370, %v388
          %v393 = vsub.f32 %v391, %v392
          %394 = vst.msk [vmem:[#allocation5] sm:$0xff] %vm389, %v393
        $region48: #{tpu_custom_call.1} parent=35 // pred_fallthru
          _
        // Predicated region
        $region49: #{tpu_custom_call.1} parent=35 // pred_check
          %p395 = pneg %p364
        $region50: #{tpu_custom_call.1} parent=35 // pred_check_branch
          %397 = sbr.rel (%p395) target = $region52
        $region51: #{tpu_custom_call.1} parent=35 // pred_region
          %v398 = vld [vmem:[#allocation4] sm:$0xff]
          %400 = vset.pattern.permute.xlu0 0
          %401 = vperm.xlu0 %400, %v398
          %v402 = vpop.permute.xlu0 %401
          %v404 = vmul.f32 %v334, %v402
          %v405 = vld [vmem:[#allocation5] sm:$0xff]
          %407 = vset.pattern.permute.xlu0 0
          %408 = vperm.xlu0 %407, %v405
          %v409 = vpop.permute.xlu0 %408
          %v411 = vadd.f32 %v404, %v409
          %v412 = vmax.f32 %v411, 0.0
          %413 = vst [vmem:[%s215] sm:$0xff] %v412
        $region52: #{tpu_custom_call.1} parent=35 // pred_fallthru
          _
        %s414 = sand.u32 %s140, 1
        %s415 = scalar_lea.sflag [#allocation7], %s414
        %s416 = sand.u32 %s140, 1
        %s417 = smul.addr %s416, 8
        %s418 = scalar_lea.vmem [#allocation6], %s417
        // Predicated region
        $region53: #{tpu_custom_call.1} parent=35 // pred_check
          %p419 = pneg %p150
        $region54: #{tpu_custom_call.1} parent=35 // pred_check_branch
          %421 = sbr.rel (%p419) target = $region56
        $region55: #{tpu_custom_call.1} parent=35 // pred_region
          %s422 = smul.u32 %s24, %s23
          %s423 = smul.u32 %s25, %s23
          %425 = vsyncadd %s415, 0
          %s426 = sadd.s32 %s423, %s422
          %s427 = smul.addr %s426, 8
          %s428 = scalar_lea.hbm %s4, %s427
          %s430 = sshll.u32 %s418, 4
          %s431 = int_to_ptr.vmem [resolvable:$true] %s430
          %s432 = sshll.u32 %s428, 4
          %s433 = int_to_ptr.hbm [resolvable:$true] %s432
          %435 = dma.vmem_to_hbm [thread:$0]  %s431, 128, %s433, %s415
        $region56: #{tpu_custom_call.1} parent=35 // pred_fallthru
          _
      $region36: #{tpu_custom_call.1} parent=5 // pred_fallthru
        _
      %p436 = scmp.le.s32.totalorder 2, %s13
      // Predicated region
      $region57: #{tpu_custom_call.1} parent=5 // pred_check
        %p437 = pneg %p436
      $region58: #{tpu_custom_call.1} parent=5 // pred_check_branch
        %439 = sbr.rel (%p437) target = $region60
      $region59: #{tpu_custom_call.1} parent=5 // pred_region
        %s440 = ssub.s32 %s13, 2
        // Predicated region
        $region61: #{tpu_custom_call.1} parent=59 // pred_check
          %p441 = pneg %p156
        $region62: #{tpu_custom_call.1} parent=59 // pred_check_branch
          %443 = sbr.rel (%p441) target = $region64
        $region63: #{tpu_custom_call.1} parent=59 // pred_region
          %s444 = sand.u32 %s141, 1
          %s445 = scalar_lea.sflag [#allocation7], %s444
          %s446 = sand.u32 %s141, 1
          %s447 = smul.addr %s446, 8
          %s448 = scalar_lea.vmem [#allocation6], %s447
          %450 = dma.done %s445, 128
        $region64: #{tpu_custom_call.1} parent=59 // pred_fallthru
          _
      $region60: #{tpu_custom_call.1} parent=5 // pred_fallthru
        _
    $region6: #{tpu_custom_call.1} parent=1 // loop_footer
      %s17 = sadd.s32 1, %s13
    $region7: #{tpu_custom_call.1} parent=1 // loop_footer_branch
      %12 = sbr.rel target = $region3
    $region8: #{tpu_custom_call.1} parent=1 // loop_exit
      _
    %451 = vsyncpa [#allocation7], 1
    %s452 = scalar_lea.sflag [#allocation7], 1
    %453 = vsyncpa %s452, 1

</llo_original>
